<compile_context>
chip_gen: v5e
topology: v5e:2x2
jax: 0.10.0
libtpu: 0.0.40
codegen_flags: <defaults>
</compile_context>

<pallas_src>
import functools
from abc import ABCMeta, abstractmethod

import jax
import jax.numpy as jnp
from jax.experimental import pallas as pl
from jax.experimental.pallas import tpu as pltpu


def _round_up(x, k):
    return ((x + k - 1) // k) * k


# ---------------------------------------------------------------------------
# Pallas kernel: fused 1x1 conv (channel mixing) + bias + ReLU,
# plus per-tile partial sum(feat^2) for the synthetic training loss.
# ---------------------------------------------------------------------------
def _extract_feat_kernel(x_ref, w_ref, b_ref, o_ref, sq_ref, *, m_total, tile_m):
    # x_ref: (C_in, TILE_M)   w_ref: (C_out, C_in)   b_ref: (C_out, 1)
    # o_ref: (C_out, TILE_M)  sq_ref: (8, 128) per-tile partial-sum slab
    y = jnp.dot(w_ref[...], x_ref[...],
                preferred_element_type=jnp.float32)           # MXU
    y = y + b_ref[...]                                        # VPU, lane bcast
    y = jnp.maximum(y, 0.0)                                   # ReLU
    o_ref[...] = y.astype(o_ref.dtype)                        # lane-dense vst

    # Per-tile partial sum of squares.  Mask columns past the true spatial
    # size (the last tile may extend beyond H*W when it does not divide).
    col = pl.program_id(1) * tile_m + jax.lax.broadcasted_iota(
        jnp.int32, y.shape, 1)
    ysq = jnp.where(col < m_total, y * y, 0.0)
    # Broadcast the scalar into an (8,128)-aligned slab so the partial-sum
    # output keeps fully aligned, per-tile *disjoint* blocks (safe under
    # "parallel" grid semantics on v7x's two TensorCores).  The wrapper reads
    # element [0, 0] of each slab; the extra bytes are negligible.
    sq_ref[...] = jnp.full(sq_ref.shape, jnp.sum(ysq), dtype=sq_ref.dtype)


def _extract_feat_pallas(x, weight, bias, *, tile_m=1024, out_dtype=jnp.float32):
    """x: (N, C_in, M) f32; weight: (C_out, C_in); bias: (C_out, 1)."""
    n, cin, m = x.shape
    cout = weight.shape[0]
    # Lane-aligned tile of the spatial axis.  1024 is a good default on
    # v5e/v6e/v7x: per-step VMEM is only ~(cin+cout)*tile*4B*2 buffers, far
    # below every generation's scoped limit, while amortizing grid overhead.
    tile = min(tile_m, _round_up(m, 128))
    grid_m = pl.cdiv(m, tile)

    kernel = functools.partial(_extract_feat_kernel, m_total=m, tile_m=tile)
    feat, sq = pl.pallas_call(
        kernel,
        out_shape=(
            jax.ShapeDtypeStruct((n, cout, m), out_dtype),
            jax.ShapeDtypeStruct((n, grid_m, 8, 128), jnp.float32),
        ),
        grid=(n, grid_m),
        in_specs=[
            pl.BlockSpec((None, cin, tile), lambda i, j: (i, 0, j)),
            pl.BlockSpec((cout, cin), lambda i, j: (0, 0)),   # resident weight
            pl.BlockSpec((cout, 1), lambda i, j: (0, 0)),     # resident bias
        ],
        out_specs=(
            pl.BlockSpec((None, cout, tile), lambda i, j: (i, 0, j)),
            pl.BlockSpec((None, None, 8, 128), lambda i, j: (i, j, 0, 0)),
        ),
        compiler_params=pltpu.CompilerParams(
            dimension_semantics=("parallel", "parallel")),
    )(x, weight, bias)
    # Tiny final reduction over per-tile partials (a few scalars).
    sq_sum = jnp.sum(sq[:, :, 0, 0])
    return feat, sq_sum


# ---------------------------------------------------------------------------
# BaseDetector: dispatch semantics reproduced faithfully
# ---------------------------------------------------------------------------
class BaseDetector(metaclass=ABCMeta):
    """Base class for detectors (JAX port of mmdet BaseDetector)."""

    def __init__(self):
        self.fp16_enabled = False

    @property
    def with_neck(self):
        return hasattr(self, 'neck') and self.neck is not None

    @property
    def with_shared_head(self):
        return hasattr(self, 'shared_head') and self.shared_head is not None

    @property
    def with_bbox(self):
        return hasattr(self, 'bbox_head') and self.bbox_head is not None

    @property
    def with_mask(self):
        return hasattr(self, 'mask_head') and self.mask_head is not None

    @abstractmethod
    def extract_feat(self, imgs):
        pass

    def extract_feats(self, imgs):
        assert isinstance(imgs, list)
        for img in imgs:
            yield self.extract_feat(img)

    @abstractmethod
    def forward_train(self, imgs, img_metas, **kwargs):
        pass

    @abstractmethod
    def simple_test(self, img, img_meta, **kwargs):
        pass

    @abstractmethod
    def aug_test(self, imgs, img_metas, **kwargs):
        pass

    def init_weights(self, pretrained=None):
        # TODO(synk): checkpoint loading / logger not applicable in this port.
        pass

    def forward_test(self, imgs, img_metas, **kwargs):
        for var, name in [(imgs, 'imgs'), (img_metas, 'img_metas')]:
            if not isinstance(var, list):
                raise TypeError('{} must be a list, but got {}'.format(
                    name, type(var)))
        num_augs = len(imgs)
        if num_augs != len(img_metas):
            raise ValueError(
                'num of augmentations ({}) != num of image meta ({})'.format(
                    len(imgs), len(img_metas)))
        if hasattr(imgs[0], 'shape'):
            imgs_per_gpu = imgs[0].shape[0]
            assert imgs_per_gpu == 1
        if num_augs == 1:
            return self.simple_test(imgs[0], img_metas[0], **kwargs)
        else:
            return self.aug_test(imgs, img_metas, **kwargs)

    def __call__(self, img, img_meta, return_loss=True, **kwargs):
        return self.forward(img, img_meta, return_loss=return_loss, **kwargs)

    def forward(self, img, img_meta, return_loss=True, **kwargs):
        if isinstance(img_meta[0], list):
            input_style = img_meta[0][0]['input_style']
        else:
            input_style = img_meta[0]['input_style']
        assert input_style in ['pcl', 'bev_sparse', 'img']
        if input_style in ('bev_sparse', 'pcl'):
            # TODO(synk): prepare_bev_sparse / prepare_sparse_input come from
            # external dataset utilities (no Pallas equivalent).
            raise NotImplementedError(
                "input_style '{}' requires external sparse-input utilities".format(
                    input_style))
        if return_loss:
            return self.forward_train(img, img_meta, **kwargs)
        else:
            return self.forward_test(img, img_meta, **kwargs)

    # TODO(synk): show_result / show_corner_hm / show_result_graph /
    # draw_key_points are cv2/matplotlib visualization + file-I/O paths with
    # no Pallas equivalent; intentionally not implemented.


# ---------------------------------------------------------------------------
# Minimal concrete detector whose extract_feat hot path runs in Pallas
# ---------------------------------------------------------------------------
class SimpleDetector(BaseDetector):
    def __init__(self, in_channels=4, out_channels=32, tile_m=1024,
                 feat_dtype=jnp.float32):
        super().__init__()
        self.in_channels = in_channels
        self.out_channels = out_channels
        self.tile_m = tile_m
        # bf16 here nearly halves the dominant HBM writeback if downstream
        # tolerates it; default f32 keeps exact parity with the reference.
        self.feat_dtype = feat_dtype
        # Deterministic synthetic parameters, PyTorch conv layout (O, I).
        key = jax.random.PRNGKey(0)
        kw, kb = jax.random.split(key)
        self.weight = (jax.random.normal(kw, (out_channels, in_channels),
                                         dtype=jnp.float32) * 0.1)
        self.bias = (jax.random.normal(kb, (out_channels, 1),
                                       dtype=jnp.float32) * 0.01)

    def extract_feat(self, imgs):
        # imgs: NCHW float32; reshape to (N, C, H*W) is a free view — no
        # transposes, spatial stays contiguous on the lane axis.
        n, c, h, w = imgs.shape
        assert c == self.in_channels
        x = imgs.reshape(n, c, h * w)
        feat_flat, sq_sum = _extract_feat_pallas(
            x, self.weight, self.bias,
            tile_m=self.tile_m, out_dtype=self.feat_dtype)
        feat = feat_flat.reshape(n, self.out_channels, h, w)
        return feat, sq_sum

    def forward_train(self, imgs, img_metas, **kwargs):
        feat, sq_sum = self.extract_feat(imgs)
        # synthetic training loss: mean of squared features (partial sums
        # computed inside the Pallas kernel).
        loss = sq_sum / jnp.float32(feat.size)
        return {'loss_feat': loss, 'feat': feat}

    def simple_test(self, img, img_meta, **kwargs):
        feat, _ = self.extract_feat(img)
        return feat

    def aug_test(self, imgs, img_metas, **kwargs):
        # TODO(synk): test-time augmentation merging not implemented.
        raise NotImplementedError


if __name__ == "__main__":
    key = jax.random.PRNGKey(0)
    N, C, H, W = 2, 4, 16, 16
    img = jax.random.normal(key, (N, C, H, W), dtype=jnp.float32)

    # tile_m=128 so the small demo image still exercises a multi-tile grid.
    det = SimpleDetector(in_channels=C, out_channels=32, tile_m=128)
    det.init_weights()

    # --- train path (return_loss=True): single-nested img / img_meta ---
    img_metas = [{'input_style': 'img'} for _ in range(N)]
    out_train = det(img, img_metas, return_loss=True)
    jax.block_until_ready(out_train['loss_feat'])
    jax.block_until_ready(out_train['feat'])
    assert out_train['feat'].shape == (N, 32, H, W)

    # --- test path (return_loss=False): double-nested, one aug, batch==1 ---
    img_test = img[:1]
    out_test = det([img_test], [[{'input_style': 'img'}]], return_loss=False)
    jax.block_until_ready(out_test)
    assert out_test.shape == (1, 32, H, W)

    # correctness check against plain-JAX reference
    ref = jnp.maximum(
        jnp.einsum('nchw,oc->nohw', img, det.weight)
        + det.bias.reshape(1, 32, 1, 1), 0.0)
    assert jnp.allclose(out_train['feat'], ref, atol=1e-5, rtol=1e-5)
    ref_loss = jnp.sum(ref * ref) / ref.size
    assert jnp.allclose(out_train['loss_feat'], ref_loss, atol=1e-6, rtol=1e-4)

    # ragged-edge check: H*W not a multiple of the tile (masked partial sums,
    # masked output writeback on the last tile)
    H2, W2 = 20, 20
    img2 = jax.random.normal(jax.random.PRNGKey(1), (1, C, H2, W2),
                             dtype=jnp.float32)
    out2 = det.forward_train(img2, [{'input_style': 'img'}])
    jax.block_until_ready(out2['feat'])
    ref2 = jnp.maximum(
        jnp.einsum('nchw,oc->nohw', img2, det.weight)
        + det.bias.reshape(1, 32, 1, 1), 0.0)
    assert jnp.allclose(out2['feat'], ref2, atol=1e-5, rtol=1e-5)
    ref2_loss = jnp.sum(ref2 * ref2) / ref2.size
    assert jnp.allclose(out2['loss_feat'], ref2_loss, atol=1e-6, rtol=1e-4)

    print("KERNEL_OK")
</pallas_src>

<mosaic_0001>
module attributes {stable_mosaic.version = 11 : i64} {
  func.func @_extract_feat_kernel(%arg0: i32, %arg1: i32, %arg2: memref<1x4x128xf32, #tpu.memory_space<vmem>>, %arg3: memref<32x4xf32, #tpu.memory_space<vmem>>, %arg4: memref<32x1xf32, #tpu.memory_space<vmem>>, %arg5: memref<1x32x128xf32, #tpu.memory_space<vmem>>, %arg6: memref<1x1x8x128xf32, #tpu.memory_space<vmem>>) attributes {dimension_semantics = [#tpu.dimension_semantics<parallel>, #tpu.dimension_semantics<parallel>], iteration_bounds = array<i64: 2, 2>, scalar_prefetch = 0 : i64, scratch_operands = 0 : i64, tpu.core_type = #tpu.core_type<tc>, window_params = [{transform_indices = @transform_0, window_bounds = array<i64: 1, 4, 128>}, {pipeline_mode = #tpu.pipeline_mode<synchronous>, transform_indices = @transform_1, window_bounds = array<i64: 32, 4>}, {pipeline_mode = #tpu.pipeline_mode<synchronous>, transform_indices = @transform_2, window_bounds = array<i64: 32, 1>}, {transform_indices = @transform_3, window_bounds = array<i64: 1, 32, 128>}, {transform_indices = @transform_4, window_bounds = array<i64: 1, 1, 8, 128>}]} {
    %c0 = arith.constant 0 : index
    %c0_0 = arith.constant 0 : index
    %0 = vector.load %arg3[%c0, %c0_0] : memref<32x4xf32, #tpu.memory_space<vmem>>, vector<32x4xf32>
    %c0_1 = arith.constant 0 : index
    %c0_2 = arith.constant 0 : index
    %c0_3 = arith.constant 0 : index
    %1 = vector.load %arg2[%c0_1, %c0_2, %c0_3] : memref<1x4x128xf32, #tpu.memory_space<vmem>>, vector<1x4x128xf32>
    %2 = vector.shape_cast %1 : vector<1x4x128xf32> to vector<4x128xf32>
    %cst = arith.constant dense<0.000000e+00> : vector<32x128xf32>
    %3 = tpu.matmul %0, %2, %cst {dimension_numbers = #tpu.dot_dimension_numbers<[1], [0], [0], [1], [0, 0, 1, 1], [], []>} : vector<32x4xf32>, vector<4x128xf32>, vector<32x128xf32> -> vector<32x128xf32>
    %c0_4 = arith.constant 0 : index
    %c0_5 = arith.constant 0 : index
    %4 = vector.load %arg4[%c0_4, %c0_5] : memref<32x1xf32, #tpu.memory_space<vmem>>, vector<32x1xf32>
    %5 = vector.broadcast %4 : vector<32x1xf32> to vector<32x128xf32>
    %6 = arith.addf %3, %5 : vector<32x128xf32>
    %cst_6 = arith.constant 0.000000e+00 : f32
    %7 = vector.broadcast %cst_6 : f32 to vector<32x128xf32>
    %8 = arith.maximumf %6, %7 : vector<32x128xf32>
    %c0_7 = arith.constant 0 : index
    %c0_8 = arith.constant 0 : index
    %c0_9 = arith.constant 0 : index
    %9 = vector.load %arg5[%c0_7, %c0_8, %c0_9] : memref<1x32x128xf32, #tpu.memory_space<vmem>>, vector<1x32x128xf32>
    %10 = vector.shape_cast %9 : vector<1x32x128xf32> to vector<32x128xf32>
    %11 = vector.shape_cast %8 : vector<32x128xf32> to vector<1x32x128xf32>
    tpu.vector_store %arg5[%c0_7, %c0_8, %c0_9], %11 {strides = array<i32>} : memref<1x32x128xf32, #tpu.memory_space<vmem>>, vector<1x32x128xf32>,
    %c128_i32 = arith.constant 128 : i32
    %12 = arith.muli %arg1, %c128_i32 : i32
    %13 = tpu.iota {dimensions = array<i32: 1>} : vector<32x128xi32>
    %14 = vector.broadcast %12 : i32 to vector<32x128xi32>
    %15 = arith.addi %14, %13 : vector<32x128xi32>
    %c256_i32 = arith.constant 256 : i32
    %16 = vector.broadcast %c256_i32 : i32 to vector<32x128xi32>
    %17 = arith.cmpi slt, %15, %16 : vector<32x128xi32>
    %18 = arith.mulf %8, %8 : vector<32x128xf32>
    %cst_10 = arith.constant 0.000000e+00 : f32
    %19 = vector.broadcast %cst_10 : f32 to vector<32x128xf32>
    %20 = arith.select %17, %18, %19 : vector<32x128xi1>, vector<32x128xf32>
    %21 = vector.shape_cast %20 : vector<32x128xf32> to vector<1x32x128xf32>
    %cst_11 = arith.constant dense<0.000000e+00> : vector<1xf32>
    %22 = vector.multi_reduction <add>, %21, %cst_11 [1, 2] : vector<1x32x128xf32> to vector<1xf32>
    %23 = vector.shape_cast %22 : vector<1xf32> to vector<1x1x1xf32>
    %24 = vector.extract %23[0, 0, 0] : f32 from vector<1x1x1xf32>
    %25 = vector.broadcast %24 : f32 to vector<8x128xf32>
    %c0_12 = arith.constant 0 : index
    %c0_13 = arith.constant 0 : index
    %c0_14 = arith.constant 0 : index
    %c0_15 = arith.constant 0 : index
    %26 = vector.load %arg6[%c0_12, %c0_13, %c0_14, %c0_15] : memref<1x1x8x128xf32, #tpu.memory_space<vmem>>, vector<1x1x8x128xf32>
    %27 = vector.shape_cast %26 : vector<1x1x8x128xf32> to vector<8x128xf32>
    %28 = vector.shape_cast %25 : vector<8x128xf32> to vector<1x1x8x128xf32>
    tpu.vector_store %arg6[%c0_12, %c0_13, %c0_14, %c0_15], %28 {strides = array<i32>} : memref<1x1x8x128xf32, #tpu.memory_space<vmem>>, vector<1x1x8x128xf32>,
    return
  }
  func.func @transform_0(%arg0: i32, %arg1: i32) -> (i32, i32, i32) {
    %c0_i32 = arith.constant 0 : i32
    %c0_i32_0 = arith.constant 0 : i32
    return %arg0, %c0_i32, %arg1 : i32, i32, i32
  }
  func.func @transform_1(%arg0: i32, %arg1: i32) -> (i32, i32) {
    %c0_i32 = arith.constant 0 : i32
    %c0_i32_0 = arith.constant 0 : i32
    %c0_i32_1 = arith.constant 0 : i32
    return %c0_i32, %c0_i32_0 : i32, i32
  }
  func.func @transform_2(%arg0: i32, %arg1: i32) -> (i32, i32) {
    %c0_i32 = arith.constant 0 : i32
    %c0_i32_0 = arith.constant 0 : i32
    %c0_i32_1 = arith.constant 0 : i32
    return %c0_i32, %c0_i32_0 : i32, i32
  }
  func.func @transform_3(%arg0: i32, %arg1: i32) -> (i32, i32, i32) {
    %c0_i32 = arith.constant 0 : i32
    %c0_i32_0 = arith.constant 0 : i32
    return %arg0, %c0_i32, %arg1 : i32, i32, i32
  }
  func.func @transform_4(%arg0: i32, %arg1: i32) -> (i32, i32, i32, i32) {
    %c0_i32 = arith.constant 0 : i32
    %c0_i32_0 = arith.constant 0 : i32
    %c0_i32_1 = arith.constant 0 : i32
    return %arg0, %arg1, %c0_i32, %c0_i32_0 : i32, i32, i32, i32
  }
}

</mosaic_0001>

<llo_original>
// kernel: tpu_custom_call.1
$region0: #{tpu_custom_call.1}
  #allocation0 [shape = 'u32[]', space=smem, size = 0x4, offset = 0x4, fixed_abs, tag = 'smem constant byte address 0x4 - core index']
  #allocation1 [shape = 'u32[72,128]{1,0:T(1,128)}', space=vmem, size = 0x9000, scoped, tag = 'internal scratch']
  %s0 = inlined_call_operand.vmem [shape: f32[2,4,256], index: 0, kind: input, shape index: {}]
  %s1 = inlined_call_operand.vmem [shape: f32[32,4], index: 1, kind: input, shape index: {}]
  %s2 = inlined_call_operand.vmem [shape: f32[32,1], index: 2, kind: input, shape index: {}]
  %s3 = inlined_call_operand.hbm [shape: f32[2,32,256], index: 3, kind: output, shape index: {0}]
  %s4 = inlined_call_operand.hbm [shape: f32[2,2,8,128], index: 4, kind: output, shape index: {1}]
  %5 = xla_tuple %s3, %s4
  %s6 = sld [smem:[#allocation0]]
  $region53: #{tpu_custom_call.1} parent=0
    _
  %s8 = ssub.s32 1, %s6
  %s9 = scalar_select 0, %s8, %s6
  $region1: #{tpu_custom_call.1} parent=0
    #allocation2 [shape = 'u8[32768]{0}', space=vmem, size = 0x8000, scoped, tag = 'output window, operand 0']
    #allocation3 [shape = 's32[2]{0}', space=sflag, size = 0x8, scoped, tag = 'scoped memory for tpu_custom_call.1']
    #allocation4 [shape = 'u8[8192]{0}', space=vmem, size = 0x2000, scoped, tag = 'output window, operand 1']
    #allocation5 [shape = 's32[2]{0}', space=sflag, size = 0x8, scoped, tag = 'scoped memory for tpu_custom_call.1']
    %10 = vsyncpa [#allocation3], 0
    %s11 = scalar_lea.sflag [#allocation3], 1
    %12 = vsyncpa %s11, 0
    %13 = vsyncpa [#allocation5], 0
    %s14 = scalar_lea.sflag [#allocation5], 1
    %15 = vsyncpa %s14, 0
    loop: start=0, step=1, limit=6
    $region2: #{tpu_custom_call.1} parent=1 // loop_pre_header
      _
    $region3: #{tpu_custom_call.1} parent=1 // loop_header
      %s17 = sphi 0, %s21
      %p18 = scmp.ge.s32.totalorder %s17, 6
      %s24 = sphi 0, %s36
      %s25 = sphi 0, %s32
      %s26 = sphi 0, %s24
      %s27 = sphi 0, %s25
      %s28 = sphi 0, %s26
      %s29 = sphi 0, %s27
      %s41 = sphi 0, %s43
      %s44 = sphi 0, %s41
      %s45 = sphi 0, %s44
      %s61 = sphi 0, %s45
      %s65 = sphi 0, %s65
      %s67 = sphi 0, %s65
      %s68 = sphi 0, %s67
      %s82 = sphi 0, %s68
      %s86 = sphi 0, %s86
      %s88 = sphi 0, %s86
      %s89 = sphi 0, %s88
      %s103 = sphi 0, %s89
      %s111 = sphi 0, %s113
      %s114 = sphi 0, %s111
      %s115 = sphi 0, %s114
      %s131 = sphi 0, %s115
      %s139 = sphi 0, %s141
      %s142 = sphi 0, %s139
      %s143 = sphi 0, %s142
      %s159 = sphi 0, %s143
    $region4: #{tpu_custom_call.1} parent=1 // loop_header_branch
      %20 = sbr.rel (%p18) target = $region8
    $region5: #{tpu_custom_call.1} parent=1 // loop_body
      %s22 = ssub.s32 %s17, 1
      %s23 = ssub.s32 %s17, 2
      %s30 = sadd.s32 1, %s25
      %p31 = scmp.ge.s32.totalorder %s30, 2
      %s32 = scalar_select %p31, 0, %s30
      %s33 = sadd.s32 1, %s24
      %s34 = scalar_select %p31, %s33, %s24
      %p35 = scmp.ge.s32.totalorder %s34, 2
      %s36 = scalar_select %p35, 0, %s34
      %s37 = ssub.s32 %s24, %s36
      %s38 = ssub.s32 %s25, %s32
      %s39 = sor.u32 %s37, %s38
      %p40 = scmp.eq.s32.totalorder %s39, 0
      %s42 = sadd.s32 %s41, 1
      %s43 = scalar_select %p40, %s41, %s42
      %p46 = pneg %p40
      %p47 = scmp.eq.s32.totalorder %s17, 3
      %p48 = por %p46, %p47
      %p49 = scmp.ne.s32.totalorder %s41, %s44
      %p50 = scmp.eq.s32.totalorder %s17, 0
      %p51 = por %p49, %p50
      %p52 = scmp.ne.s32.totalorder %s41, %s44
      %p53 = scmp.eq.s32.totalorder %s22, 3
      %p54 = por %p52, %p53
      %p55 = scmp.ne.s32.totalorder %s44, %s45
      %p56 = scmp.eq.s32.totalorder %s22, 0
      %p57 = por %p55, %p56
      %p58 = scmp.ne.s32.totalorder %s44, %s45
      %p59 = scmp.eq.s32.totalorder %s23, 3
      %p60 = por %p58, %p59
      %p62 = scmp.ne.s32.totalorder %s45, %s61
      %p63 = scmp.eq.s32.totalorder %s23, 0
      %p64 = por %p62, %p63
      %s66 = sadd.s32 %s65, 1
      %p69 = scmp.eq.s32.totalorder %s17, 3
      %p70 = scmp.ne.s32.totalorder %s65, %s67
      %p71 = scmp.eq.s32.totalorder %s17, 0
      %p72 = por %p70, %p71
      %p73 = scmp.ne.s32.totalorder %s65, %s67
      %p74 = scmp.eq.s32.totalorder %s22, 3
      %p75 = por %p73, %p74
      %p76 = scmp.ne.s32.totalorder %s67, %s68
      %p77 = scmp.eq.s32.totalorder %s22, 0
      %p78 = por %p76, %p77
      %p79 = scmp.ne.s32.totalorder %s67, %s68
      %p80 = scmp.eq.s32.totalorder %s23, 3
      %p81 = por %p79, %p80
      %p83 = scmp.ne.s32.totalorder %s68, %s82
      %p84 = scmp.eq.s32.totalorder %s23, 0
      %p85 = por %p83, %p84
      %s87 = sadd.s32 %s86, 1
      %p90 = scmp.eq.s32.totalorder %s17, 3
      %p91 = scmp.ne.s32.totalorder %s86, %s88
      %p92 = scmp.eq.s32.totalorder %s17, 0
      %p93 = por %p91, %p92
      %p94 = scmp.ne.s32.totalorder %s86, %s88
      %p95 = scmp.eq.s32.totalorder %s22, 3
      %p96 = por %p94, %p95
      %p97 = scmp.ne.s32.totalorder %s88, %s89
      %p98 = scmp.eq.s32.totalorder %s22, 0
      %p99 = por %p97, %p98
      %p100 = scmp.ne.s32.totalorder %s88, %s89
      %p101 = scmp.eq.s32.totalorder %s23, 3
      %p102 = por %p100, %p101
      %p104 = scmp.ne.s32.totalorder %s89, %s103
      %p105 = scmp.eq.s32.totalorder %s23, 0
      %p106 = por %p104, %p105
      %s107 = ssub.s32 %s24, %s36
      %s108 = ssub.s32 %s25, %s32
      %s109 = sor.u32 %s107, %s108
      %p110 = scmp.eq.s32.totalorder %s109, 0
      %s112 = sadd.s32 %s111, 1
      %s113 = scalar_select %p110, %s111, %s112
      %p116 = pneg %p110
      %p117 = scmp.eq.s32.totalorder %s17, 3
      %p118 = por %p116, %p117
      %p119 = scmp.ne.s32.totalorder %s111, %s114
      %p120 = scmp.eq.s32.totalorder %s17, 0
      %p121 = por %p119, %p120
      %p122 = scmp.ne.s32.totalorder %s111, %s114
      %p123 = scmp.eq.s32.totalorder %s22, 3
      %p124 = por %p122, %p123
      %p125 = scmp.ne.s32.totalorder %s114, %s115
      %p126 = scmp.eq.s32.totalorder %s22, 0
      %p127 = por %p125, %p126
      %p128 = scmp.ne.s32.totalorder %s114, %s115
      %p129 = scmp.eq.s32.totalorder %s23, 3
      %p130 = por %p128, %p129
      %p132 = scmp.ne.s32.totalorder %s115, %s131
      %p133 = scmp.eq.s32.totalorder %s23, 0
      %p134 = por %p132, %p133
      %s135 = ssub.s32 %s24, %s36
      %s136 = ssub.s32 %s25, %s32
      %s137 = sor.u32 %s135, %s136
      %p138 = scmp.eq.s32.totalorder %s137, 0
      %s140 = sadd.s32 %s139, 1
      %s141 = scalar_select %p138, %s139, %s140
      %p144 = pneg %p138
      %p145 = scmp.eq.s32.totalorder %s17, 3
      %p146 = por %p144, %p145
      %p147 = scmp.ne.s32.totalorder %s139, %s142
      %p148 = scmp.eq.s32.totalorder %s17, 0
      %p149 = por %p147, %p148
      %p150 = scmp.ne.s32.totalorder %s139, %s142
      %p151 = scmp.eq.s32.totalorder %s22, 3
      %p152 = por %p150, %p151
      %p153 = scmp.ne.s32.totalorder %s142, %s143
      %p154 = scmp.eq.s32.totalorder %s22, 0
      %p155 = por %p153, %p154
      %p156 = scmp.ne.s32.totalorder %s142, %s143
      %p157 = scmp.eq.s32.totalorder %s23, 3
      %p158 = por %p156, %p157
      %p160 = scmp.ne.s32.totalorder %s143, %s159
      %p161 = scmp.eq.s32.totalorder %s23, 0
      %p162 = por %p160, %p161
      %p163 = scmp.le.s32.totalorder 1, %s17
      %p164 = scmp.lt.s32.totalorder %s17, 5
      %p165 = pnand %p163, %p164
      %p166 = pneg %p165
      // Predicated region
      $region9: #{tpu_custom_call.1} parent=5 // pred_check
        _
      $region10: #{tpu_custom_call.1} parent=5 // pred_check_branch
        %168 = sbr.rel (%p165) target = $region12
      $region11: #{tpu_custom_call.1} parent=5 // pred_region
        %s169 = ssub.s32 %s17, 1
        // Predicated region
        $region13: #{tpu_custom_call.1} parent=11 // pred_check
          %p170 = pneg %p78
        $region14: #{tpu_custom_call.1} parent=11 // pred_check_branch
          %172 = sbr.rel (%p170) target = $region16
        $region15: #{tpu_custom_call.1} parent=11 // pred_region
          _
        $region16: #{tpu_custom_call.1} parent=11 // pred_fallthru
          _
        // Predicated region
        $region17: #{tpu_custom_call.1} parent=11 // pred_check
          %p173 = pneg %p99
        $region18: #{tpu_custom_call.1} parent=11 // pred_check_branch
          %175 = sbr.rel (%p173) target = $region20
        $region19: #{tpu_custom_call.1} parent=11 // pred_region
          _
        $region20: #{tpu_custom_call.1} parent=11 // pred_fallthru
          _
      $region12: #{tpu_custom_call.1} parent=5 // pred_fallthru
        _
      %p176 = scmp.lt.s32.totalorder %s17, 4
      // Predicated region
      $region21: #{tpu_custom_call.1} parent=5 // pred_check
        %p177 = pneg %p176
      $region22: #{tpu_custom_call.1} parent=5 // pred_check_branch
        %179 = sbr.rel (%p177) target = $region24
      $region23: #{tpu_custom_call.1} parent=5 // pred_region
        // Predicated region
        $region25: #{tpu_custom_call.1} parent=23 // pred_check
          %p180 = pneg %p51
        $region26: #{tpu_custom_call.1} parent=23 // pred_check_branch
          %182 = sbr.rel (%p180) target = $region28
        $region27: #{tpu_custom_call.1} parent=23 // pred_region
          %p183 = scmp.lt.s32.totalorder %s24, 1
          %s184 = scalar_select %p183, %s24, 1
          %p185 = scmp.lt.s32.totalorder %s25, 1
          %s186 = scalar_select %p185, %s25, 1
          %s187 = smul.addr %s184, 2
          %s188 = sadd.s32 %s186, %s187
          %s189 = smul.addr %s188, 4
          %s190 = scalar_lea.vmem %s0, %s189
        $region28: #{tpu_custom_call.1} parent=23 // pred_fallthru
          _
      $region24: #{tpu_custom_call.1} parent=5 // pred_fallthru
        _
      %p191 = scmp.le.s32.totalorder 1, %s17
      %p192 = scmp.lt.s32.totalorder %s17, 5
      %p193 = pnand %p191, %p192
      %p194 = pneg %p193
      // Predicated region
      $region29: #{tpu_custom_call.1} parent=5 // pred_check
        _
      $region30: #{tpu_custom_call.1} parent=5 // pred_check_branch
        %196 = sbr.rel (%p193) target = $region32
      $region31: #{tpu_custom_call.1} parent=5 // pred_region
        %s197 = ssub.s32 %s17, 1
        %p198 = scmp.lt.s32.totalorder %s26, 1
        %s199 = scalar_select %p198, %s26, 1
        %p200 = scmp.lt.s32.totalorder %s27, 1
        %s201 = scalar_select %p200, %s27, 1
        %s202 = smul.addr %s199, 2
        %s203 = sadd.s32 %s201, %s202
        %s204 = smul.addr %s203, 4
        %s205 = scalar_lea.vmem %s0, %s204
        %p206 = pneg %p57
        %p207 = pneg %p54
        %p208 = pneg %p78
        %p209 = pneg %p75
        %p210 = pneg %p99
        %p211 = pneg %p96
        %p212 = pneg %p127
        %p213 = pneg %p124
        %s214 = sand.u32 %s114, 1
        %s215 = scalar_lea.sflag [#allocation3], %s214
        %s216 = sand.u32 %s114, 1
        %s217 = smul.addr %s216, 32
        %s218 = scalar_lea.vmem [#allocation2], %s217
        %p219 = pneg %p155
        %p220 = pneg %p152
        %s221 = sand.u32 %s142, 1
        %s222 = scalar_lea.sflag [#allocation5], %s221
        %s223 = sand.u32 %s142, 1
        %s224 = smul.addr %s223, 8
        %s225 = scalar_lea.vmem [#allocation4], %s224
        %p226 = scmp.lt.s32.totalorder %s26, 1
        %s227 = scalar_select %p226, %s26, 1
        %p228 = scmp.lt.s32.totalorder %s27, 1
        %s229 = scalar_select %p228, %s27, 1
        %s230 = smul.addr %s227, 2
        %s231 = sadd.s32 %s229, %s230
        %s232 = smul.addr %s231, 4
        %s233 = scalar_lea.vmem %s0, %s232
        %v234 = vld [vmem:[%s1] sm:$0xff]
        %v235 = vld [vmem:[%s1 + $0x8] sm:$0xff]
        %v236 = vld [vmem:[%s1 + $0x10] sm:$0xff]
        %v237 = vld [vmem:[%s1 + $0x18] sm:$0xff]
        %v238 = vld [vmem:[%s233] sm:$0xf]
        %v239 = vld [vmem:[%s2] sm:$0xff]
        %v240 = vld [vmem:[%s2 + $0x8] sm:$0xff]
        %v241 = vld [vmem:[%s2 + $0x10] sm:$0xff]
        %v242 = vld [vmem:[%s2 + $0x18] sm:$0xff]
        %244 = vset.pattern.permute.xlu0 0
        %245 = vperm.xlu0 %244, %v239
        %v246 = vpop.permute.xlu0 %245
        %249 = vset.pattern.permute.xlu0 0
        %250 = vperm.xlu0 %249, %v240
        %v251 = vpop.permute.xlu0 %250
        %254 = vset.pattern.permute.xlu0 0
        %255 = vperm.xlu0 %254, %v241
        %v256 = vpop.permute.xlu0 %255
        %259 = vset.pattern.permute.xlu0 0
        %260 = vperm.xlu0 %259, %v242
        %v261 = vpop.permute.xlu0 %260
        %vm263 = vcmask 31744
        %v265 = vsel %vm263, %v234, 0
        %v268 = vsel %vm263, %v235, 0
        %v271 = vsel %vm263, %v236, 0
        %v274 = vsel %vm263, %v237, 0
        %vm276 = vcmask 1043456
        %v278 = vsel %vm276, %v238, 0
        %280 = vmatpush.msra.mxu0 0.0
        %281 = vmatpush.msra.mxu0 0.0
        %282 = vmatpush.msra.mxu0 0.0
        %283 = vmatpush.msra.mxu0 0.0
        %284 = vmatpush.msra.mxu0 0.0
        %285 = vmatpush.msra.mxu0 0.0
        %286 = vmatpush.msra.mxu0 0.0
        %287 = vmatpush.msra.mxu0 0.0
        %288 = vmatpush.msra.mxu0 0.0
        %289 = vmatpush.msra.mxu0 0.0
        %290 = vmatpush.msra.mxu0 0.0
        %291 = vmatpush.msra.mxu0 0.0
        %292 = vmatpush.msra.mxu0 0.0
        %293 = vmatpush.msra.mxu0 0.0
        %294 = vmatpush.msra.mxu0 0.0
        %295 = vmatpush.msra.mxu0 %v278
        %296 = vmatmul.f32.gmra.mxu0 %v265
        %v297 = vpop.f32.mrf.mxu0
        %v298 = vadd.f32 %v246, %v297
        %299 = vmatmul.f32.gmra.mxu0 %v268
        %v300 = vpop.f32.mrf.mxu0
        %v301 = vadd.f32 %v251, %v300
        %302 = vmatmul.f32.gmra.mxu0 %v271
        %v303 = vpop.f32.mrf.mxu0
        %v304 = vadd.f32 %v256, %v303
        %305 = vmatmul.f32.gmra.mxu0 %v274
        %v306 = vpop.f32.mrf.mxu0
        %v307 = vadd.f32 %v261, %v306
        %308 = vdwg.mxu0
        %v309 = vmax.f32 %v298, 0.0
        %v310 = vmax.f32 %v301, 0.0
        %v311 = vmax.f32 %v304, 0.0
        %v312 = vmax.f32 %v307, 0.0
        %313 = vst [vmem:[%s218] sm:$0xff] %v309
        %314 = vst [vmem:[%s218 + $0x8] sm:$0xff] %v310
        %315 = vst [vmem:[%s218 + $0x10] sm:$0xff] %v311
        %316 = vst [vmem:[%s218 + $0x18] sm:$0xff] %v312
        %s317 = smul.u32 %s27, 128
        %v318 = vlaneseq
        %v319 = vand.u32 %v318, 127
        %v320 = vstv %s317
        %v321 = vadd.s32 %v320, %v319
        %vm322 = vcmp.lt.s32.totalorder %v321, 256
        %v323 = vmul.f32 %v309, %v309
        %v324 = vmul.f32 %v310, %v310
        %v325 = vmul.f32 %v311, %v311
        %v326 = vmul.f32 %v312, %v312
        %v327 = vsel %vm322, %v323, 0.0
        %v328 = vsel %vm322, %v324, 0.0
        %v329 = vsel %vm322, %v325, 0.0
        %v330 = vsel %vm322, %v326, 0.0
        %v331 = vadd.f32 %v327, %v328
        %v332 = vadd.f32 %v331, %v329
        %v333 = vadd.f32 %v332, %v330
        %334 = vadd.xlane.f32.xlu0 %v333
        %v335 = vpop.xlane.xlu0 %334
        %v336 = vrot.slane %v335, 4
        %v337 = vadd.f32 %v335, %v336
        %v338 = vrot.slane %v337, 2
        %v339 = vadd.f32 %v337, %v338
        %v340 = vrot.slane %v339, 1
        %v341 = vadd.f32 %v339, %v340
        %s342 = vtos %v341
        %v343 = vstv %s342
        %344 = vst [vmem:[%s225] sm:$0xff] %v343
        %s345 = sand.u32 %s114, 1
        %s346 = scalar_lea.sflag [#allocation3], %s345
        %s347 = sand.u32 %s114, 1
        %s348 = smul.addr %s347, 32
        %s349 = scalar_lea.vmem [#allocation2], %s348
        %s350 = sand.u32 %s142, 1
        %s351 = scalar_lea.sflag [#allocation5], %s350
        %s352 = sand.u32 %s142, 1
        %s353 = smul.addr %s352, 8
        %s354 = scalar_lea.vmem [#allocation4], %s353
        // Predicated region
        $region33: #{tpu_custom_call.1} parent=31 // pred_check
          %p355 = pneg %p124
        $region34: #{tpu_custom_call.1} parent=31 // pred_check_branch
          %357 = sbr.rel (%p355) target = $region36
        $region35: #{tpu_custom_call.1} parent=31 // pred_region
          %359 = vsyncadd %s346, 0
          %s360 = smul.addr %s26, 8
          %s361 = sadd.s32 %s27, %s360
          %s362 = smul.addr %s361, 8
          %s363 = scalar_lea.hbm %s3, %s362
          %s364 = sshll.u32 %s349, 4
          %s365 = int_to_ptr.vmem [resolvable:$true] %s364
          %s366 = sshll.u32 %s363, 4
          %s367 = int_to_ptr.hbm [resolvable:$true] %s366
          %372 = dma.vmem_to_hbm [thread:$0]  %s365, 512, %s367, %s346, 128, 256, 8
        $region36: #{tpu_custom_call.1} parent=31 // pred_fallthru
          _
        // Predicated region
        $region37: #{tpu_custom_call.1} parent=31 // pred_check
          %p373 = pneg %p152
        $region38: #{tpu_custom_call.1} parent=31 // pred_check_branch
          %375 = sbr.rel (%p373) target = $region40
        $region39: #{tpu_custom_call.1} parent=31 // pred_region
          %377 = vsyncadd %s351, 0
          %s378 = smul.addr %s26, 2
          %s379 = sadd.s32 %s27, %s378
          %s380 = smul.addr %s379, 8
          %s381 = scalar_lea.hbm %s4, %s380
          %s383 = sshll.u32 %s354, 4
          %s384 = int_to_ptr.vmem [resolvable:$true] %s383
          %s385 = sshll.u32 %s381, 4
          %s386 = int_to_ptr.hbm [resolvable:$true] %s385
          %388 = dma.vmem_to_hbm [thread:$0]  %s384, 128, %s386, %s351
        $region40: #{tpu_custom_call.1} parent=31 // pred_fallthru
          _
      $region32: #{tpu_custom_call.1} parent=5 // pred_fallthru
        _
      %p389 = scmp.le.s32.totalorder 2, %s17
      // Predicated region
      $region41: #{tpu_custom_call.1} parent=5 // pred_check
        %p390 = pneg %p389
      $region42: #{tpu_custom_call.1} parent=5 // pred_check_branch
        %392 = sbr.rel (%p390) target = $region44
      $region43: #{tpu_custom_call.1} parent=5 // pred_region
        %s393 = ssub.s32 %s17, 2
        // Predicated region
        $region45: #{tpu_custom_call.1} parent=43 // pred_check
          %p394 = pneg %p130
        $region46: #{tpu_custom_call.1} parent=43 // pred_check_branch
          %396 = sbr.rel (%p394) target = $region48
        $region47: #{tpu_custom_call.1} parent=43 // pred_region
          %s397 = sand.u32 %s115, 1
          %s398 = scalar_lea.sflag [#allocation3], %s397
          %s399 = sand.u32 %s115, 1
          %s400 = smul.addr %s399, 32
          %s401 = scalar_lea.vmem [#allocation2], %s400
          %403 = dma.done %s398, 512
        $region48: #{tpu_custom_call.1} parent=43 // pred_fallthru
          _
        // Predicated region
        $region49: #{tpu_custom_call.1} parent=43 // pred_check
          %p404 = pneg %p158
        $region50: #{tpu_custom_call.1} parent=43 // pred_check_branch
          %406 = sbr.rel (%p404) target = $region52
        $region51: #{tpu_custom_call.1} parent=43 // pred_region
          %s407 = sand.u32 %s143, 1
          %s408 = scalar_lea.sflag [#allocation5], %s407
          %s409 = sand.u32 %s143, 1
          %s410 = smul.addr %s409, 8
          %s411 = scalar_lea.vmem [#allocation4], %s410
          %413 = dma.done %s408, 128
        $region52: #{tpu_custom_call.1} parent=43 // pred_fallthru
          _
      $region44: #{tpu_custom_call.1} parent=5 // pred_fallthru
        _
    $region6: #{tpu_custom_call.1} parent=1 // loop_footer
      %s21 = sadd.s32 1, %s17
    $region7: #{tpu_custom_call.1} parent=1 // loop_footer_branch
      %16 = sbr.rel target = $region3
    $region8: #{tpu_custom_call.1} parent=1 // loop_exit
      _
    %414 = vsyncpa [#allocation3], 1
    %s415 = scalar_lea.sflag [#allocation3], 1
    %416 = vsyncpa %s415, 1
    %417 = vsyncpa [#allocation5], 1
    %s418 = scalar_lea.sflag [#allocation5], 1
    %419 = vsyncpa %s418, 1

</llo_original>
